<compile_context>
chip_gen: v5e
topology: v5e:2x2
jax: 0.10.0
libtpu: 0.0.40
codegen_flags: <defaults>
</compile_context>

<pallas_src>
import jax
import jax.numpy as jnp
from jax import lax
from jax.experimental import pallas as pl
from jax.experimental.pallas import tpu as pltpu

EPS = 1e-5


def withnorm_kernel(x_ref, w_ref, b_ref, o_ref):
    # x_ref: (tm, D) row tile (f32); w_ref: (D_out, D_in) gamma-folded weight (bf16);
    # b_ref: (1, D_out) beta-folded bias (f32); o_ref: (tm, D_out).
    x = x_ref[...].astype(jnp.float32)
    d = x.shape[-1]
    inv_d = 1.0 / d

    # --- LayerNorm over the last dim (single pass: sum + sum of squares) ---
    s = jnp.sum(x, axis=-1, keepdims=True)
    sq = jnp.sum(x * x, axis=-1, keepdims=True)
    mean = s * inv_d
    var = jnp.maximum(sq * inv_d - mean * mean, 0.0)
    inv = lax.rsqrt(var + EPS)
    xn = ((x - mean) * inv).astype(jnp.bfloat16)

    # --- fn = Linear:  xn @ W'^T + b'  (W' in PyTorch (out, in) layout) ---
    # Contract xn dim 1 with w dim 1 -> no transposed weight needed in HBM.
    out = lax.dot_general(
        xn, w_ref[...],
        dimension_numbers=(((1,), (1,)), ((), ())),
        preferred_element_type=jnp.float32,
    )
    o_ref[...] = (out + b_ref[...]).astype(o_ref.dtype)


def with_norm(x, gamma, beta, w, b, *, tm=512):
    """x: (B, S, D) float32; gamma/beta/b: (D,); w: (D, D) PyTorch (out, in).

    Returns Linear(LayerNorm(x)) with shape (B, S, D).
    """
    B, S, D = x.shape
    rows = B * S
    x2 = x.reshape(rows, D)

    # Fold the LayerNorm affine into the Linear (host-side, one-time):
    #   y @ W^T + b  with  y = xn*gamma + beta
    #     = xn @ (W * gamma)^T + (W @ beta + b)
    w_fold = (w * gamma[None, :]).astype(jnp.bfloat16)        # (D_out, D_in)
    b_fold = (jnp.dot(w, beta) + b).astype(jnp.float32).reshape(1, D)

    # Clamp the row tile to the (8-aligned) row count; keep it a sublane multiple.
    rows_pad8 = ((rows + 7) // 8) * 8
    tm_eff = min(((tm + 7) // 8) * 8, rows_pad8)
    grid = (pl.cdiv(rows, tm_eff),)

    out = pl.pallas_call(
        withnorm_kernel,
        out_shape=jax.ShapeDtypeStruct((rows, D), x.dtype),
        grid_spec=pltpu.PrefetchScalarGridSpec(
            num_scalar_prefetch=0,
            grid=grid,
            in_specs=[
                pl.BlockSpec((tm_eff, D), lambda i: (i, 0)),   # x row tile (streamed)
                pl.BlockSpec((D, D), lambda i: (0, 0)),        # folded weight (resident)
                pl.BlockSpec((1, D), lambda i: (0, 0)),        # folded bias
            ],
            out_specs=pl.BlockSpec((tm_eff, D), lambda i: (i, 0)),
        ),
        compiler_params=pltpu.CompilerParams(
            dimension_semantics=("parallel",),
            # For large D, raise vmem_limit_bytes here (and single-buffer the
            # weight block) — at D=128 the default scoped VMEM is plenty.
        ),
    )(x2, w_fold, b_fold)
    return out.reshape(B, S, D)


def reference(x, gamma, beta, w, b):
    # Pure-f32 reference: nn.LayerNorm (biased var, eps inside rsqrt) + nn.Linear.
    mean = jnp.mean(x, axis=-1, keepdims=True)
    var = jnp.mean((x - mean) ** 2, axis=-1, keepdims=True)
    xn = (x - mean) * lax.rsqrt(var + EPS)
    y = xn * gamma + beta
    return jnp.einsum("bsd,od->bso", y, w) + b


if __name__ == "__main__":
    # Small but non-trivial shapes: rows = B*S = 200 does NOT divide the row
    # tile, exercising the ragged-tail path; tm=64 keeps grid length > 1.
    B, S, D = 2, 100, 128
    key = jax.random.PRNGKey(0)
    kx, kw, kb, kg = jax.random.split(key, 4)

    x = jax.random.normal(kx, (B, S, D), dtype=jnp.float32)

    # Deterministic parameters implied by LayerNorm(D) + Linear(D, D).
    gamma = 1.0 + 0.1 * jax.random.normal(kg, (D,), dtype=jnp.float32)
    beta = jnp.linspace(-0.05, 0.05, D, dtype=jnp.float32)
    w = jax.random.normal(kw, (D, D), dtype=jnp.float32) * (1.0 / jnp.sqrt(D))
    b = 0.01 * jax.random.normal(kb, (D,), dtype=jnp.float32)

    out = with_norm(x, gamma, beta, w, b, tm=64)
    out = jax.block_until_ready(out)

    ref = reference(x, gamma, beta, w, b)
    assert out.shape == (B, S, D)
    # bf16 MXU matmul with f32 accumulation -> slightly looser tolerance than
    # the all-f32 path (error ~4e-3 at D=128 for O(1) activations).
    assert jnp.allclose(out, ref, atol=3e-2, rtol=3e-2), "mismatch vs reference"

    print("KERNEL_OK")
</pallas_src>

<mosaic_0001>
module attributes {stable_mosaic.version = 11 : i64} {
  func.func @withnorm_kernel(%arg0: i32, %arg1: memref<64x128xf32, #tpu.memory_space<vmem>>, %arg2: memref<128x128xbf16, #tpu.memory_space<vmem>>, %arg3: memref<1x128xf32, #tpu.memory_space<vmem>>, %arg4: memref<64x128xf32, #tpu.memory_space<vmem>>) attributes {dimension_semantics = [#tpu.dimension_semantics<parallel>], iteration_bounds = array<i64: 4>, scalar_prefetch = 0 : i64, scratch_operands = 0 : i64, tpu.core_type = #tpu.core_type<tc>, window_params = [{transform_indices = @transform_0, window_bounds = array<i64: 64, 128>}, {pipeline_mode = #tpu.pipeline_mode<synchronous>, transform_indices = @transform_1, window_bounds = array<i64: 128, 128>}, {pipeline_mode = #tpu.pipeline_mode<synchronous>, transform_indices = @transform_2, window_bounds = array<i64: 1, 128>}, {transform_indices = @transform_3, window_bounds = array<i64: 64, 128>}]} {
    %c0 = arith.constant 0 : index
    %c0_0 = arith.constant 0 : index
    %0 = vector.load %arg1[%c0, %c0_0] : memref<64x128xf32, #tpu.memory_space<vmem>>, vector<64x128xf32>
    %cst = arith.constant dense<0.000000e+00> : vector<64xf32>
    %1 = vector.multi_reduction <add>, %0, %cst [1] : vector<64x128xf32> to vector<64xf32>
    %2 = vector.shape_cast %1 : vector<64xf32> to vector<64x1xf32>
    %3 = arith.mulf %0, %0 : vector<64x128xf32>
    %cst_1 = arith.constant dense<0.000000e+00> : vector<64xf32>
    %4 = vector.multi_reduction <add>, %3, %cst_1 [1] : vector<64x128xf32> to vector<64xf32>
    %5 = vector.shape_cast %4 : vector<64xf32> to vector<64x1xf32>
    %cst_2 = arith.constant 7.812500e-03 : f32
    %6 = vector.broadcast %cst_2 : f32 to vector<64x1xf32>
    %7 = arith.mulf %2, %6 : vector<64x1xf32>
    %cst_3 = arith.constant 7.812500e-03 : f32
    %8 = vector.broadcast %cst_3 : f32 to vector<64x1xf32>
    %9 = arith.mulf %5, %8 : vector<64x1xf32>
    %10 = arith.mulf %7, %7 : vector<64x1xf32>
    %11 = arith.subf %9, %10 : vector<64x1xf32>
    %cst_4 = arith.constant 0.000000e+00 : f32
    %12 = vector.broadcast %cst_4 : f32 to vector<64x1xf32>
    %13 = arith.maximumf %11, %12 : vector<64x1xf32>
    %cst_5 = arith.constant 9.99999974E-6 : f32
    %14 = vector.broadcast %cst_5 : f32 to vector<64x1xf32>
    %15 = arith.addf %13, %14 : vector<64x1xf32>
    %16 = math.rsqrt %15 : vector<64x1xf32>
    %17 = vector.broadcast %7 : vector<64x1xf32> to vector<64x128xf32>
    %18 = arith.subf %0, %17 : vector<64x128xf32>
    %19 = vector.broadcast %16 : vector<64x1xf32> to vector<64x128xf32>
    %20 = arith.mulf %18, %19 : vector<64x128xf32>
    %21 = arith.truncf %20 : vector<64x128xf32> to vector<64x128xbf16>
    %c0_6 = arith.constant 0 : index
    %c0_7 = arith.constant 0 : index
    %22 = vector.load %arg2[%c0_6, %c0_7] : memref<128x128xbf16, #tpu.memory_space<vmem>>, vector<128x128xbf16>
    %cst_8 = arith.constant dense<0.000000e+00> : vector<64x128xf32>
    %23 = tpu.matmul %21, %22, %cst_8 {dimension_numbers = #tpu.dot_dimension_numbers<[1], [1], [0], [0], [0, 0, 1, 0], [], []>} : vector<64x128xbf16>, vector<128x128xbf16>, vector<64x128xf32> -> vector<64x128xf32>
    %c0_9 = arith.constant 0 : index
    %c0_10 = arith.constant 0 : index
    %24 = vector.load %arg3[%c0_9, %c0_10] : memref<1x128xf32, #tpu.memory_space<vmem>>, vector<1x128xf32>
    %25 = vector.broadcast %24 : vector<1x128xf32> to vector<64x128xf32>
    %26 = arith.addf %23, %25 : vector<64x128xf32>
    %c0_11 = arith.constant 0 : index
    %c0_12 = arith.constant 0 : index
    %27 = vector.load %arg4[%c0_11, %c0_12] : memref<64x128xf32, #tpu.memory_space<vmem>>, vector<64x128xf32>
    tpu.vector_store %arg4[%c0_11, %c0_12], %26 {strides = array<i32>} : memref<64x128xf32, #tpu.memory_space<vmem>>, vector<64x128xf32>,
    return
  }
  func.func @transform_0(%arg0: i32) -> (i32, i32) {
    %c0_i32 = arith.constant 0 : i32
    %c0_i32_0 = arith.constant 0 : i32
    return %arg0, %c0_i32 : i32, i32
  }
  func.func @transform_1(%arg0: i32) -> (i32, i32) {
    %c0_i32 = arith.constant 0 : i32
    %c0_i32_0 = arith.constant 0 : i32
    %c0_i32_1 = arith.constant 0 : i32
    return %c0_i32, %c0_i32_0 : i32, i32
  }
  func.func @transform_2(%arg0: i32) -> (i32, i32) {
    %c0_i32 = arith.constant 0 : i32
    %c0_i32_0 = arith.constant 0 : i32
    %c0_i32_1 = arith.constant 0 : i32
    return %c0_i32, %c0_i32_0 : i32, i32
  }
  func.func @transform_3(%arg0: i32) -> (i32, i32) {
    %c0_i32 = arith.constant 0 : i32
    %c0_i32_0 = arith.constant 0 : i32
    return %arg0, %c0_i32 : i32, i32
  }
}

</mosaic_0001>

<llo_original>
// kernel: tpu_custom_call.1
$region0: #{tpu_custom_call.1}
  #allocation0 [shape = 'u32[]', space=smem, size = 0x4, offset = 0x4, fixed_abs, tag = 'smem constant byte address 0x4 - core index']
  #allocation1 [shape = 'u32[72,128]{1,0:T(1,128)}', space=vmem, size = 0x9000, scoped, tag = 'internal scratch']
  %s0 = inlined_call_operand.hbm [shape: f32[200,128], index: 0, kind: input, shape index: {}]
  %s1 = inlined_call_operand.hbm [shape: bf16[128,128], index: 1, kind: input, shape index: {}]
  %s2 = inlined_call_operand.vmem [shape: f32[1,128], index: 2, kind: input, shape index: {}]
  %s3 = inlined_call_operand.hbm [shape: f32[200,128], index: 3, kind: output, shape index: {}]
  %s4 = sld [smem:[#allocation0]]
  $region53: #{tpu_custom_call.1} parent=0
    _
  %s6 = ssub.s32 1, %s4
  %s7 = scalar_select 0, %s6, %s4
  $region1: #{tpu_custom_call.1} parent=0
    #allocation2 [shape = 'u8[65536]{0}', space=vmem, size = 0x10000, scoped, tag = 'input window, operand 0']
    #allocation3 [shape = 's32[2]{0}', space=sflag, size = 0x8, scoped, tag = 'scoped memory for tpu_custom_call.1']
    #allocation4 [shape = 's32[2]{0}', space=sflag, size = 0x8, scoped, tag = 'scoped memory for tpu_custom_call.1']
    #allocation5 [shape = 'u8[32768]{0}', space=vmem, size = 0x8000, scoped, tag = 'input window, operand 1, single buffered']
    #allocation6 [shape = 's32[1]{0}', space=sflag, size = 0x4, scoped, tag = 'scoped memory for tpu_custom_call.1']
    #allocation7 [shape = 'u8[65536]{0}', space=vmem, size = 0x10000, scoped, tag = 'output window, operand 0']
    %8 = vsyncpa [#allocation3], 0
    %s9 = scalar_lea.sflag [#allocation3], 1
    %10 = vsyncpa %s9, 0
    %11 = vsyncpa [#allocation6], 0
    %12 = vsyncpa [#allocation4], 0
    %s13 = scalar_lea.sflag [#allocation4], 1
    %14 = vsyncpa %s13, 0
    loop: start=0, step=1, limit=6
    $region2: #{tpu_custom_call.1} parent=1 // loop_pre_header
      _
    $region3: #{tpu_custom_call.1} parent=1 // loop_header
      %s16 = sphi 0, %s20
      %p17 = scmp.ge.s32.totalorder %s16, 6
      %s26 = sphi 0, %s28
      %s29 = sphi 0, %s26
      %s30 = sphi 0, %s29
      %s46 = sphi 0, %s30
      %s50 = sphi 0, %s50
      %s52 = sphi 0, %s50
      %s53 = sphi 0, %s52
      %s67 = sphi 0, %s53
      %s71 = sphi 0, %s71
      %s73 = sphi 0, %s71
      %s74 = sphi 0, %s73
      %s88 = sphi 0, %s74
      %s94 = sphi 0, %s96
      %s97 = sphi 0, %s94
      %s98 = sphi 0, %s97
      %s114 = sphi 0, %s98
    $region4: #{tpu_custom_call.1} parent=1 // loop_header_branch
      %19 = sbr.rel (%p17) target = $region8
    $region5: #{tpu_custom_call.1} parent=1 // loop_body
      %s21 = ssub.s32 %s16, 1
      %s22 = ssub.s32 %s16, 2
      %s23 = sadd.s32 %s16, 1
      %s24 = ssub.s32 %s16, %s23
      %p25 = scmp.eq.s32.totalorder %s24, 0
      %s27 = sadd.s32 %s26, 1
      %s28 = scalar_select %p25, %s26, %s27
      %p31 = pneg %p25
      %p32 = scmp.eq.s32.totalorder %s16, 3
      %p33 = por %p31, %p32
      %p34 = scmp.ne.s32.totalorder %s26, %s29
      %p35 = scmp.eq.s32.totalorder %s16, 0
      %p36 = por %p34, %p35
      %p37 = scmp.ne.s32.totalorder %s26, %s29
      %p38 = scmp.eq.s32.totalorder %s21, 3
      %p39 = por %p37, %p38
      %p40 = scmp.ne.s32.totalorder %s29, %s30
      %p41 = scmp.eq.s32.totalorder %s21, 0
      %p42 = por %p40, %p41
      %p43 = scmp.ne.s32.totalorder %s29, %s30
      %p44 = scmp.eq.s32.totalorder %s22, 3
      %p45 = por %p43, %p44
      %p47 = scmp.ne.s32.totalorder %s30, %s46
      %p48 = scmp.eq.s32.totalorder %s22, 0
      %p49 = por %p47, %p48
      %s51 = sadd.s32 %s50, 1
      %p54 = scmp.eq.s32.totalorder %s16, 3
      %p55 = scmp.ne.s32.totalorder %s50, %s52
      %p56 = scmp.eq.s32.totalorder %s16, 0
      %p57 = por %p55, %p56
      %p58 = scmp.ne.s32.totalorder %s50, %s52
      %p59 = scmp.eq.s32.totalorder %s21, 3
      %p60 = por %p58, %p59
      %p61 = scmp.ne.s32.totalorder %s52, %s53
      %p62 = scmp.eq.s32.totalorder %s21, 0
      %p63 = por %p61, %p62
      %p64 = scmp.ne.s32.totalorder %s52, %s53
      %p65 = scmp.eq.s32.totalorder %s22, 3
      %p66 = por %p64, %p65
      %p68 = scmp.ne.s32.totalorder %s53, %s67
      %p69 = scmp.eq.s32.totalorder %s22, 0
      %p70 = por %p68, %p69
      %s72 = sadd.s32 %s71, 1
      %p75 = scmp.eq.s32.totalorder %s16, 3
      %p76 = scmp.ne.s32.totalorder %s71, %s73
      %p77 = scmp.eq.s32.totalorder %s16, 0
      %p78 = por %p76, %p77
      %p79 = scmp.ne.s32.totalorder %s71, %s73
      %p80 = scmp.eq.s32.totalorder %s21, 3
      %p81 = por %p79, %p80
      %p82 = scmp.ne.s32.totalorder %s73, %s74
      %p83 = scmp.eq.s32.totalorder %s21, 0
      %p84 = por %p82, %p83
      %p85 = scmp.ne.s32.totalorder %s73, %s74
      %p86 = scmp.eq.s32.totalorder %s22, 3
      %p87 = por %p85, %p86
      %p89 = scmp.ne.s32.totalorder %s74, %s88
      %p90 = scmp.eq.s32.totalorder %s22, 0
      %p91 = por %p89, %p90
      %s92 = ssub.s32 %s16, %s23
      %p93 = scmp.eq.s32.totalorder %s92, 0
      %s95 = sadd.s32 %s94, 1
      %s96 = scalar_select %p93, %s94, %s95
      %p99 = pneg %p93
      %p100 = scmp.eq.s32.totalorder %s16, 3
      %p101 = por %p99, %p100
      %p102 = scmp.ne.s32.totalorder %s94, %s97
      %p103 = scmp.eq.s32.totalorder %s16, 0
      %p104 = por %p102, %p103
      %p105 = scmp.ne.s32.totalorder %s94, %s97
      %p106 = scmp.eq.s32.totalorder %s21, 3
      %p107 = por %p105, %p106
      %p108 = scmp.ne.s32.totalorder %s97, %s98
      %p109 = scmp.eq.s32.totalorder %s21, 0
      %p110 = por %p108, %p109
      %p111 = scmp.ne.s32.totalorder %s97, %s98
      %p112 = scmp.eq.s32.totalorder %s22, 3
      %p113 = por %p111, %p112
      %p115 = scmp.ne.s32.totalorder %s98, %s114
      %p116 = scmp.eq.s32.totalorder %s22, 0
      %p117 = por %p115, %p116
      %p118 = scmp.le.s32.totalorder 1, %s16
      %p119 = scmp.lt.s32.totalorder %s16, 5
      %p120 = pnand %p118, %p119
      %p121 = pneg %p120
      // Predicated region
      $region9: #{tpu_custom_call.1} parent=5 // pred_check
        _
      $region10: #{tpu_custom_call.1} parent=5 // pred_check_branch
        %123 = sbr.rel (%p120) target = $region12
      $region11: #{tpu_custom_call.1} parent=5 // pred_region
        %s124 = ssub.s32 %s16, 1
        // Predicated region
        $region13: #{tpu_custom_call.1} parent=11 // pred_check
          %p125 = pneg %p63
        $region14: #{tpu_custom_call.1} parent=11 // pred_check_branch
          %127 = sbr.rel (%p125) target = $region16
        $region15: #{tpu_custom_call.1} parent=11 // pred_region
          %129 = vsyncadd [#allocation6], 0
          %s130 = sshll.u32 %s1, 4
          %s131 = int_to_ptr.hbm [resolvable:$true] %s130
          %s132 = sshll.u32 [#allocation5], 4
          %s133 = int_to_ptr.vmem [resolvable:$true] %s132
          %138 = dma.hbm_to_vmem [thread:$0]  %s131, 1024, %s133, [#allocation6], 64, 64, 4
        $region16: #{tpu_custom_call.1} parent=11 // pred_fallthru
          _
        // Predicated region
        $region17: #{tpu_custom_call.1} parent=11 // pred_check
          %p139 = pneg %p84
        $region18: #{tpu_custom_call.1} parent=11 // pred_check_branch
          %141 = sbr.rel (%p139) target = $region20
        $region19: #{tpu_custom_call.1} parent=11 // pred_region
          _
        $region20: #{tpu_custom_call.1} parent=11 // pred_fallthru
          _
      $region12: #{tpu_custom_call.1} parent=5 // pred_fallthru
        _
      %p142 = scmp.lt.s32.totalorder %s16, 4
      // Predicated region
      $region21: #{tpu_custom_call.1} parent=5 // pred_check
        %p143 = pneg %p142
      $region22: #{tpu_custom_call.1} parent=5 // pred_check_branch
        %145 = sbr.rel (%p143) target = $region24
      $region23: #{tpu_custom_call.1} parent=5 // pred_region
        // Predicated region
        $region25: #{tpu_custom_call.1} parent=23 // pred_check
          %p146 = pneg %p36
        $region26: #{tpu_custom_call.1} parent=23 // pred_check_branch
          %148 = sbr.rel (%p146) target = $region28
        $region27: #{tpu_custom_call.1} parent=23 // pred_region
          %s149 = sand.u32 %s26, 1
          %s150 = scalar_lea.sflag [#allocation3], %s149
          %s151 = sand.u32 %s26, 1
          %s152 = smul.addr %s151, 64
          %s153 = scalar_lea.vmem [#allocation2], %s152
          %s154 = smul.u32 8, %s16
          %s155 = ssub.s32 25, %s154
          %p156 = scmp.lt.s32.totalorder %s155, 8
          %s157 = scalar_select %p156, %s155, 8
          %s158 = smul.u32 8, %s157
          %s159 = ssub.s32 64, %s158
          %s160 = sshll.u32 %s159, 4
          %161 = vsyncadd %s150, %s160
          %p162 = scmp.ne.s32.totalorder 0, %s158
          %s163 = smul.addr %s154, 8
          %s164 = scalar_lea.hbm %s0, %s163
          %s165 = smul.u32 8, %s157
          %s166 = sshll.u32 %s164, 4
          %s167 = int_to_ptr.hbm [resolvable:$true] %s166
          %s168 = sshll.u32 %s153, 4
          %s169 = int_to_ptr.vmem [resolvable:$true] %s168
          %s170 = sshll.u32 %s165, 4
          %174 = dma.hbm_to_vmem [thread:$0]  (%p162), %s167, %s170, %s169, %s150, 128, 128, 8
        $region28: #{tpu_custom_call.1} parent=23 // pred_fallthru
          _
      $region24: #{tpu_custom_call.1} parent=5 // pred_fallthru
        _
      %p175 = scmp.le.s32.totalorder 1, %s16
      %p176 = scmp.lt.s32.totalorder %s16, 5
      %p177 = pnand %p175, %p176
      %p178 = pneg %p177
      // Predicated region
      $region29: #{tpu_custom_call.1} parent=5 // pred_check
        _
      $region30: #{tpu_custom_call.1} parent=5 // pred_check_branch
        %180 = sbr.rel (%p177) target = $region32
      $region31: #{tpu_custom_call.1} parent=5 // pred_region
        %s181 = ssub.s32 %s16, 1
        %s182 = sand.u32 %s29, 1
        %s183 = scalar_lea.sflag [#allocation3], %s182
        %s184 = sand.u32 %s29, 1
        %s185 = smul.addr %s184, 64
        %s186 = scalar_lea.vmem [#allocation2], %s185
        // Predicated region
        $region33: #{tpu_custom_call.1} parent=31 // pred_check
          %p187 = pneg %p42
        $region34: #{tpu_custom_call.1} parent=31 // pred_check_branch
          %189 = sbr.rel (%p187) target = $region36
        $region35: #{tpu_custom_call.1} parent=31 // pred_region
          %191 = dma.done %s183, 1024
        $region36: #{tpu_custom_call.1} parent=31 // pred_fallthru
          _
        // Predicated region
        $region37: #{tpu_custom_call.1} parent=31 // pred_check
          %p192 = pneg %p63
        $region38: #{tpu_custom_call.1} parent=31 // pred_check_branch
          %194 = sbr.rel (%p192) target = $region40
        $region39: #{tpu_custom_call.1} parent=31 // pred_region
          %196 = dma.done [#allocation6], 1024
        $region40: #{tpu_custom_call.1} parent=31 // pred_fallthru
          _
        %s197 = sand.u32 %s29, 1
        %s198 = scalar_lea.sflag [#allocation3], %s197
        %s199 = sand.u32 %s29, 1
        %s200 = smul.addr %s199, 64
        %s201 = scalar_lea.vmem [#allocation2], %s200
        %p202 = pneg %p42
        %p203 = pneg %p39
        %p204 = pneg %p63
        %p205 = pneg %p60
        %p206 = pneg %p84
        %p207 = pneg %p81
        %p208 = pneg %p110
        %p209 = pneg %p107
        %s210 = sand.u32 %s97, 1
        %s211 = scalar_lea.sflag [#allocation4], %s210
        %s212 = sand.u32 %s97, 1
        %s213 = smul.addr %s212, 64
        %s214 = scalar_lea.vmem [#allocation7], %s213
        %s215 = smul.u32 8, %s21
        %s216 = ssub.s32 25, %s215
        %p217 = scmp.lt.s32.totalorder %s216, 8
        %s218 = scalar_select %p217, %s216, 8
        %s219 = smul.u32 8, %s218
        %s220 = smul.u32 8, %s21
        %s221 = ssub.s32 25, %s220
        %p222 = scmp.lt.s32.totalorder %s221, 8
        %s223 = scalar_select %p222, %s221, 8
        %s224 = smul.u32 8, %s223
        %v225 = vld [vmem:[%s186] sm:$0xff]
        %v226 = vld [vmem:[%s186 + $0x8] sm:$0xff]
        %v227 = vld [vmem:[%s186 + $0x10] sm:$0xff]
        %v228 = vld [vmem:[%s186 + $0x18] sm:$0xff]
        %v229 = vld [vmem:[%s186 + $0x20] sm:$0xff]
        %v230 = vld [vmem:[%s186 + $0x28] sm:$0xff]
        %v231 = vld [vmem:[%s186 + $0x30] sm:$0xff]
        %v232 = vld [vmem:[%s186 + $0x38] sm:$0xff]
        %233 = vadd.xlane.f32.xlu0 %v225
        %v234 = vpop.xlane.xlu0 %233
        %235 = vadd.xlane.f32.xlu0 %v226
        %v236 = vpop.xlane.xlu0 %235
        %237 = vadd.xlane.f32.xlu0 %v227
        %v238 = vpop.xlane.xlu0 %237
        %239 = vadd.xlane.f32.xlu0 %v228
        %v240 = vpop.xlane.xlu0 %239
        %241 = vadd.xlane.f32.xlu0 %v229
        %v242 = vpop.xlane.xlu0 %241
        %243 = vadd.xlane.f32.xlu0 %v230
        %v244 = vpop.xlane.xlu0 %243
        %245 = vadd.xlane.f32.xlu0 %v231
        %v246 = vpop.xlane.xlu0 %245
        %247 = vadd.xlane.f32.xlu0 %v232
        %v248 = vpop.xlane.xlu0 %247
        %v249 = vmul.f32 %v225, %v225
        %v250 = vmul.f32 %v226, %v226
        %v251 = vmul.f32 %v227, %v227
        %v252 = vmul.f32 %v228, %v228
        %v253 = vmul.f32 %v229, %v229
        %v254 = vmul.f32 %v230, %v230
        %v255 = vmul.f32 %v231, %v231
        %v256 = vmul.f32 %v232, %v232
        %257 = vadd.xlane.f32.xlu0 %v249
        %v258 = vpop.xlane.xlu0 %257
        %259 = vadd.xlane.f32.xlu0 %v250
        %v260 = vpop.xlane.xlu0 %259
        %261 = vadd.xlane.f32.xlu0 %v251
        %v262 = vpop.xlane.xlu0 %261
        %263 = vadd.xlane.f32.xlu0 %v252
        %v264 = vpop.xlane.xlu0 %263
        %265 = vadd.xlane.f32.xlu0 %v253
        %v266 = vpop.xlane.xlu0 %265
        %267 = vadd.xlane.f32.xlu0 %v254
        %v268 = vpop.xlane.xlu0 %267
        %269 = vadd.xlane.f32.xlu0 %v255
        %v270 = vpop.xlane.xlu0 %269
        %271 = vadd.xlane.f32.xlu0 %v256
        %v272 = vpop.xlane.xlu0 %271
        %v273 = vmul.f32 %v234, 0.0078125
        %v274 = vmul.f32 %v236, 0.0078125
        %v275 = vmul.f32 %v238, 0.0078125
        %v276 = vmul.f32 %v240, 0.0078125
        %v277 = vmul.f32 %v242, 0.0078125
        %v278 = vmul.f32 %v244, 0.0078125
        %v279 = vmul.f32 %v246, 0.0078125
        %v280 = vmul.f32 %v248, 0.0078125
        %v281 = vmul.f32 %v258, 0.0078125
        %v282 = vmul.f32 %v260, 0.0078125
        %v283 = vmul.f32 %v262, 0.0078125
        %v284 = vmul.f32 %v264, 0.0078125
        %v285 = vmul.f32 %v266, 0.0078125
        %v286 = vmul.f32 %v268, 0.0078125
        %v287 = vmul.f32 %v270, 0.0078125
        %v288 = vmul.f32 %v272, 0.0078125
        %v289 = vmul.f32 %v273, %v273
        %v290 = vmul.f32 %v274, %v274
        %v291 = vmul.f32 %v275, %v275
        %v292 = vmul.f32 %v276, %v276
        %v293 = vmul.f32 %v277, %v277
        %v294 = vmul.f32 %v278, %v278
        %v295 = vmul.f32 %v279, %v279
        %v296 = vmul.f32 %v280, %v280
        %v297 = vsub.f32 %v281, %v289
        %v298 = vsub.f32 %v282, %v290
        %v299 = vsub.f32 %v283, %v291
        %v300 = vsub.f32 %v284, %v292
        %v301 = vsub.f32 %v285, %v293
        %v302 = vsub.f32 %v286, %v294
        %v303 = vsub.f32 %v287, %v295
        %v304 = vsub.f32 %v288, %v296
        %v305 = vmax.f32 %v297, 0.0
        %v306 = vmax.f32 %v298, 0.0
        %v307 = vmax.f32 %v299, 0.0
        %v308 = vmax.f32 %v300, 0.0
        %v309 = vmax.f32 %v301, 0.0
        %v310 = vmax.f32 %v302, 0.0
        %v311 = vmax.f32 %v303, 0.0
        %v312 = vmax.f32 %v304, 0.0
        %v313 = vadd.f32 %v305, 1e-05
        %v314 = vadd.f32 %v306, 1e-05
        %v315 = vadd.f32 %v307, 1e-05
        %v316 = vadd.f32 %v308, 1e-05
        %v317 = vadd.f32 %v309, 1e-05
        %v318 = vadd.f32 %v310, 1e-05
        %v319 = vadd.f32 %v311, 1e-05
        %v320 = vadd.f32 %v312, 1e-05
        %v321 = vrsqrt.pop %v313
        %v322 = vmul.f32 %v321, %v313
        %v323 = vmul.f32 %v322, %v321
        %v324 = vmul.f32 0.5, %v323
        %v325 = vsub.f32 1.5, %v324
        %v326 = vmul.f32 %v321, %v325
        %vm327 = vweird.f32 %v313
        %vm328 = vweird.f32 %v321
        %vm329 = vmor %vm327, %vm328
        %v330 = vsel %vm329, %v321, %v326
        %v331 = vrsqrt.pop %v314
        %v332 = vmul.f32 %v331, %v314
        %v333 = vmul.f32 %v332, %v331
        %v334 = vmul.f32 0.5, %v333
        %v335 = vsub.f32 1.5, %v334
        %v336 = vmul.f32 %v331, %v335
        %vm337 = vweird.f32 %v314
        %vm338 = vweird.f32 %v331
        %vm339 = vmor %vm337, %vm338
        %v340 = vsel %vm339, %v331, %v336
        %v341 = vrsqrt.pop %v315
        %v342 = vmul.f32 %v341, %v315
        %v343 = vmul.f32 %v342, %v341
        %v344 = vmul.f32 0.5, %v343
        %v345 = vsub.f32 1.5, %v344
        %v346 = vmul.f32 %v341, %v345
        %vm347 = vweird.f32 %v315
        %vm348 = vweird.f32 %v341
        %vm349 = vmor %vm347, %vm348
        %v350 = vsel %vm349, %v341, %v346
        %v351 = vrsqrt.pop %v316
        %v352 = vmul.f32 %v351, %v316
        %v353 = vmul.f32 %v352, %v351
        %v354 = vmul.f32 0.5, %v353
        %v355 = vsub.f32 1.5, %v354
        %v356 = vmul.f32 %v351, %v355
        %vm357 = vweird.f32 %v316
        %vm358 = vweird.f32 %v351
        %vm359 = vmor %vm357, %vm358
        %v360 = vsel %vm359, %v351, %v356
        %v361 = vrsqrt.pop %v317
        %v362 = vmul.f32 %v361, %v317
        %v363 = vmul.f32 %v362, %v361
        %v364 = vmul.f32 0.5, %v363
        %v365 = vsub.f32 1.5, %v364
        %v366 = vmul.f32 %v361, %v365
        %vm367 = vweird.f32 %v317
        %vm368 = vweird.f32 %v361
        %vm369 = vmor %vm367, %vm368
        %v370 = vsel %vm369, %v361, %v366
        %v371 = vrsqrt.pop %v318
        %v372 = vmul.f32 %v371, %v318
        %v373 = vmul.f32 %v372, %v371
        %v374 = vmul.f32 0.5, %v373
        %v375 = vsub.f32 1.5, %v374
        %v376 = vmul.f32 %v371, %v375
        %vm377 = vweird.f32 %v318
        %vm378 = vweird.f32 %v371
        %vm379 = vmor %vm377, %vm378
        %v380 = vsel %vm379, %v371, %v376
        %v381 = vrsqrt.pop %v319
        %v382 = vmul.f32 %v381, %v319
        %v383 = vmul.f32 %v382, %v381
        %v384 = vmul.f32 0.5, %v383
        %v385 = vsub.f32 1.5, %v384
        %v386 = vmul.f32 %v381, %v385
        %vm387 = vweird.f32 %v319
        %vm388 = vweird.f32 %v381
        %vm389 = vmor %vm387, %vm388
        %v390 = vsel %vm389, %v381, %v386
        %v391 = vrsqrt.pop %v320
        %v392 = vmul.f32 %v391, %v320
        %v393 = vmul.f32 %v392, %v391
        %v394 = vmul.f32 0.5, %v393
        %v395 = vsub.f32 1.5, %v394
        %v396 = vmul.f32 %v391, %v395
        %vm397 = vweird.f32 %v320
        %vm398 = vweird.f32 %v391
        %vm399 = vmor %vm397, %vm398
        %v400 = vsel %vm399, %v391, %v396
        %v401 = vsub.f32 %v225, %v273
        %v402 = vsub.f32 %v226, %v274
        %v403 = vsub.f32 %v227, %v275
        %v404 = vsub.f32 %v228, %v276
        %v405 = vsub.f32 %v229, %v277
        %v406 = vsub.f32 %v230, %v278
        %v407 = vsub.f32 %v231, %v279
        %v408 = vsub.f32 %v232, %v280
        %v409 = vmul.f32 %v401, %v330
        %v410 = vmul.f32 %v402, %v340
        %v411 = vmul.f32 %v403, %v350
        %v412 = vmul.f32 %v404, %v360
        %v413 = vmul.f32 %v405, %v370
        %v414 = vmul.f32 %v406, %v380
        %v415 = vmul.f32 %v407, %v390
        %v416 = vmul.f32 %v408, %v400
        %v417 = vpack.c.bf16 %v410, %v409
        %v418 = vpack.c.bf16 %v412, %v411
        %v419 = vpack.c.bf16 %v414, %v413
        %v420 = vpack.c.bf16 %v416, %v415
        %v421 = vld [vmem:[#allocation5] sm:$0xf]
        %v422 = vld [vmem:[#allocation5 + $0x4] sm:$0xf]
        %v423 = vld [vmem:[#allocation5 + $0x8] sm:$0xf]
        %v424 = vld [vmem:[#allocation5 + $0xc] sm:$0xf]
        %v425 = vld [vmem:[#allocation5 + $0x10] sm:$0xf]
        %v426 = vld [vmem:[#allocation5 + $0x14] sm:$0xf]
        %v427 = vld [vmem:[#allocation5 + $0x18] sm:$0xf]
        %v428 = vld [vmem:[#allocation5 + $0x1c] sm:$0xf]
        %v429 = vld [vmem:[#allocation5 + $0x20] sm:$0xf]
        %v430 = vld [vmem:[#allocation5 + $0x24] sm:$0xf]
        %v431 = vld [vmem:[#allocation5 + $0x28] sm:$0xf]
        %v432 = vld [vmem:[#allocation5 + $0x2c] sm:$0xf]
        %v433 = vld [vmem:[#allocation5 + $0x30] sm:$0xf]
        %v434 = vld [vmem:[#allocation5 + $0x34] sm:$0xf]
        %v435 = vld [vmem:[#allocation5 + $0x38] sm:$0xf]
        %v436 = vld [vmem:[#allocation5 + $0x3c] sm:$0xf]
        %v437 = vld [vmem:[%s2] sm:$0x1]
        %v439 = vperm.slane %v437, 0
        %v457 = vunpack.c.l.b16 %v421
        %v458 = vunpack.c.l.b16 %v422
        %v459 = vunpack.c.l.b16 %v423
        %v460 = vunpack.c.l.b16 %v424
        %v461 = vunpack.c.l.b16 %v425
        %v462 = vunpack.c.l.b16 %v426
        %v463 = vunpack.c.l.b16 %v427
        %v464 = vunpack.c.l.b16 %v428
        %v465 = vunpack.c.l.b16 %v429
        %v466 = vunpack.c.l.b16 %v430
        %v467 = vunpack.c.l.b16 %v431
        %v468 = vunpack.c.l.b16 %v432
        %v469 = vunpack.c.l.b16 %v433
        %v470 = vunpack.c.l.b16 %v434
        %v471 = vunpack.c.l.b16 %v435
        %v472 = vunpack.c.l.b16 %v436
        %v473 = vpack.c.b16 %v458, %v457
        %v474 = vpack.c.b16 %v460, %v459
        %v475 = vpack.c.b16 %v462, %v461
        %v476 = vpack.c.b16 %v464, %v463
        %v477 = vpack.c.b16 %v466, %v465
        %v478 = vpack.c.b16 %v468, %v467
        %v479 = vpack.c.b16 %v470, %v469
        %v480 = vpack.c.b16 %v472, %v471
        %489 = vmatpush.bf16.xpose.msra.mxu0 %v480
        %490 = vmatpush.bf16.xpose.msra.mxu0 %v479
        %491 = vmatpush.bf16.xpose.msra.mxu0 %v478
        %492 = vmatpush.bf16.xpose.msra.mxu0 %v477
        %493 = vmatpush.bf16.xpose.msra.mxu0 %v476
        %494 = vmatpush.bf16.xpose.msra.mxu0 %v475
        %495 = vmatpush.bf16.xpose.msra.mxu0 %v474
        %496 = vmatpush.bf16.xpose.msra.mxu0 %v473
        %497 = vmatmul.bf16.gmra.mxu0 %v417
        %v498 = vpop.f32.mrf.mxu0
        %v499 = vadd.f32 %v439, %v498
        %v500 = vpop.f32.mrf.mxu0
        %v501 = vadd.f32 %v439, %v500
        %502 = vmatmul.bf16.gmra.mxu0 %v418
        %v503 = vpop.f32.mrf.mxu0
        %v504 = vadd.f32 %v439, %v503
        %v505 = vpop.f32.mrf.mxu0
        %v506 = vadd.f32 %v439, %v505
        %507 = vmatmul.bf16.gmra.mxu0 %v419
        %v508 = vpop.f32.mrf.mxu0
        %v509 = vadd.f32 %v439, %v508
        %v510 = vpop.f32.mrf.mxu0
        %v511 = vadd.f32 %v439, %v510
        %512 = vmatmul.bf16.gmra.mxu0 %v420
        %v513 = vpop.f32.mrf.mxu0
        %v514 = vadd.f32 %v439, %v513
        %v515 = vpop.f32.mrf.mxu0
        %v516 = vadd.f32 %v439, %v515
        %517 = vdwg.mxu0
        %518 = vst [vmem:[%s214] sm:$0xff] %v499
        %519 = vst [vmem:[%s214 + $0x8] sm:$0xff] %v501
        %520 = vst [vmem:[%s214 + $0x10] sm:$0xff] %v504
        %521 = vst [vmem:[%s214 + $0x18] sm:$0xff] %v506
        %522 = vst [vmem:[%s214 + $0x20] sm:$0xff] %v509
        %523 = vst [vmem:[%s214 + $0x28] sm:$0xff] %v511
        %524 = vst [vmem:[%s214 + $0x30] sm:$0xff] %v514
        %525 = vst [vmem:[%s214 + $0x38] sm:$0xff] %v516
        %s526 = sand.u32 %s97, 1
        %s527 = scalar_lea.sflag [#allocation4], %s526
        %s528 = sand.u32 %s97, 1
        %s529 = smul.addr %s528, 64
        %s530 = scalar_lea.vmem [#allocation7], %s529
        // Predicated region
        $region41: #{tpu_custom_call.1} parent=31 // pred_check
          %p531 = pneg %p107
        $region42: #{tpu_custom_call.1} parent=31 // pred_check_branch
          %533 = sbr.rel (%p531) target = $region44
        $region43: #{tpu_custom_call.1} parent=31 // pred_region
          %s534 = smul.u32 8, %s21
          %s535 = ssub.s32 25, %s534
          %p536 = scmp.lt.s32.totalorder %s535, 8
          %s537 = scalar_select %p536, %s535, 8
          %s538 = smul.u32 8, %s537
          %s539 = ssub.s32 64, %s538
          %s540 = sshll.u32 %s539, 4
          %541 = vsyncadd %s527, %s540
          %p542 = scmp.ne.s32.totalorder 0, %s538
          %s543 = smul.addr %s534, 8
          %s544 = scalar_lea.hbm %s3, %s543
          %s545 = smul.u32 8, %s537
          %s546 = sshll.u32 %s530, 4
          %s547 = int_to_ptr.vmem [resolvable:$true] %s546
          %s548 = sshll.u32 %s544, 4
          %s549 = int_to_ptr.hbm [resolvable:$true] %s548
          %s550 = sshll.u32 %s545, 4
          %554 = dma.vmem_to_hbm [thread:$0]  (%p542), %s547, %s550, %s549, %s527, 128, 128, 8
        $region44: #{tpu_custom_call.1} parent=31 // pred_fallthru
          _
      $region32: #{tpu_custom_call.1} parent=5 // pred_fallthru
        _
      %p555 = scmp.le.s32.totalorder 2, %s16
      // Predicated region
      $region45: #{tpu_custom_call.1} parent=5 // pred_check
        %p556 = pneg %p555
      $region46: #{tpu_custom_call.1} parent=5 // pred_check_branch
        %558 = sbr.rel (%p556) target = $region48
      $region47: #{tpu_custom_call.1} parent=5 // pred_region
        %s559 = ssub.s32 %s16, 2
        // Predicated region
        $region49: #{tpu_custom_call.1} parent=47 // pred_check
          %p560 = pneg %p113
        $region50: #{tpu_custom_call.1} parent=47 // pred_check_branch
          %562 = sbr.rel (%p560) target = $region52
        $region51: #{tpu_custom_call.1} parent=47 // pred_region
          %s563 = sand.u32 %s98, 1
          %s564 = scalar_lea.sflag [#allocation4], %s563
          %s565 = sand.u32 %s98, 1
          %s566 = smul.addr %s565, 64
          %s567 = scalar_lea.vmem [#allocation7], %s566
          %569 = dma.done %s564, 1024
        $region52: #{tpu_custom_call.1} parent=47 // pred_fallthru
          _
      $region48: #{tpu_custom_call.1} parent=5 // pred_fallthru
        _
    $region6: #{tpu_custom_call.1} parent=1 // loop_footer
      %s20 = sadd.s32 1, %s16
    $region7: #{tpu_custom_call.1} parent=1 // loop_footer_branch
      %15 = sbr.rel target = $region3
    $region8: #{tpu_custom_call.1} parent=1 // loop_exit
      _
    %570 = vsyncpa [#allocation3], 1
    %s571 = scalar_lea.sflag [#allocation3], 1
    %572 = vsyncpa %s571, 1
    %573 = vsyncpa [#allocation6], 1
    %574 = vsyncpa [#allocation4], 1
    %s575 = scalar_lea.sflag [#allocation4], 1
    %576 = vsyncpa %s575, 1

</llo_original>
